<compile_context>
chip_gen: v7x
topology: tpu7x:2x2x1
jax: 0.10.0
libtpu: 0.0.40
codegen_flags: <defaults>
</compile_context>

<pallas_src>
import functools
import math

import jax
import jax.numpy as jnp
from jax.experimental import pallas as pl
from jax.experimental.pallas import tpu as pltpu

_NEG_BIG = -1e30  # finite "minus infinity": exp(_NEG_BIG - m) underflows to 0


def _round_up(v, m):
    return (v + m - 1) // m * m


# ---------------------------------------------------------------------------
# Kernels
# ---------------------------------------------------------------------------
def _ls_single_kernel(y_ref, x_ref, out_ref, *, b, tile_b, certainty, smooth):
    """Full class row per block.  grid = (num_batch_tiles,), all 'parallel'."""
    i = pl.program_id(0)
    x = x_ref[...].astype(jnp.float32)                     # (tile_b, c)
    y = y_ref[...]                                         # (tile_b, 1) int32

    col = jax.lax.broadcasted_iota(jnp.int32, x.shape, 1)
    w = jnp.where(col == y, certainty, smooth)             # per-row weights sum to 1
    wx = jnp.sum(w * x, axis=1, keepdims=True)             # (tile_b, 1)

    m = jnp.max(x, axis=1, keepdims=True)
    lse = jnp.log(jnp.sum(jnp.exp(x - m), axis=1, keepdims=True)) + m

    part = wx - lse                                        # sum_j label_ij*logp_ij per row
    row = i * tile_b + jax.lax.broadcasted_iota(jnp.int32, part.shape, 0)
    part = jnp.where(row < b, part, 0.0)                   # mask padded batch rows
    out_ref[...] = jnp.sum(part, axis=0, keepdims=True)    # (1, 1) per-tile partial


def _ls_split_kernel(y_ref, x_ref, out_ref, m_sc, l_sc, ws_sc, *,
                     b, c, tile_b, tile_c, certainty, smooth):
    """Class dim split over an inner reduction axis with online logsumexp."""
    i = pl.program_id(0)
    k = pl.program_id(1)

    @pl.when(k == 0)
    def _():
        m_sc[...] = jnp.full(m_sc.shape, _NEG_BIG, m_sc.dtype)
        l_sc[...] = jnp.zeros(l_sc.shape, l_sc.dtype)
        ws_sc[...] = jnp.zeros(ws_sc.shape, ws_sc.dtype)

    x = x_ref[...].astype(jnp.float32)                     # (tile_b, tile_c)
    y = y_ref[...]                                         # (tile_b, 1) int32

    col = k * tile_c + jax.lax.broadcasted_iota(jnp.int32, x.shape, 1)
    valid = col < c                                        # mask padded class cols
    w = jnp.where(col == y, certainty, smooth)
    ws_sc[...] += jnp.sum(jnp.where(valid, w * x, 0.0), axis=1, keepdims=True)

    xm = jnp.where(valid, x, _NEG_BIG)
    m_old = m_sc[...]
    m_new = jnp.maximum(m_old, jnp.max(xm, axis=1, keepdims=True))
    l_sc[...] = (l_sc[...] * jnp.exp(m_old - m_new)
                 + jnp.sum(jnp.exp(xm - m_new), axis=1, keepdims=True))
    m_sc[...] = m_new

    @pl.when(k == pl.num_programs(1) - 1)
    def _():
        part = ws_sc[...] - m_sc[...] - jnp.log(l_sc[...])
        row = i * tile_b + jax.lax.broadcasted_iota(jnp.int32, part.shape, 0)
        part = jnp.where(row < b, part, 0.0)               # mask padded batch rows
        out_ref[...] = jnp.sum(part, axis=0, keepdims=True)


# ---------------------------------------------------------------------------
# Tiling plan
# ---------------------------------------------------------------------------
def _plan_tiles(b, c, itemsize):
    """Returns (tile_b, tile_c, split, vmem_limit_bytes)."""
    # Sublane alignment: 8 rows for 32-bit, 16 for bf16, 32 for int8/fp8.
    row_align = max(8, 32 // itemsize)

    try:  # generation-gated: v5e/v6e ~128 MiB VMEM, v7x 64 MiB per TensorCore
        vmem_cap = int(pltpu.get_tpu_info().vmem_capacity_bytes)
    except Exception:  # conservative fallback if the query is unavailable
        vmem_cap = 64 * 1024 * 1024

    total = min(24 << 20, vmem_cap // 4)     # VMEM budget for this pallas_call
    # Per-element VMEM: double-buffered native-dtype x block + ~3 f32-sized
    # in-kernel working copies (cast, weighted product, exp).
    bpe = 2 * itemsize + 3 * 4
    y_row = 2 * 512                          # (tile_b,1) i32 block, lane-padded to 128, x2 bufs
    scr_row = 3 * 512                        # m / l / weighted-sum scratch (split path only)

    if bpe * c + y_row <= total // row_align:
        # Single pass over classes: full row per block.
        split = False
        tile_c = c
        per_row = bpe * c + y_row
        tile_b = max(row_align, (total // per_row) // row_align * row_align)
        if tile_b >= b:
            tile_b = b                       # block dim == full array dim is always legal
    else:
        # Vocab-scale c: split the class dim, online logsumexp in VMEM scratch.
        split = True
        tile_b = row_align
        fixed = y_row + scr_row
        avail = max(bpe * 128 * tile_b, total - tile_b * fixed)
        tile_c = max(128, (avail // (bpe * tile_b)) // 128 * 128)
        tile_c = min(tile_c, _round_up(c, 128))
        per_row = bpe * tile_c + fixed       # re-spend leftover budget on taller tiles
        tile_b = max(row_align, (total // per_row) // row_align * row_align)
        if tile_b >= b:
            tile_b = b

    need = (bpe * tile_b * tile_c
            + tile_b * y_row
            + (tile_b * scr_row if split else 0)
            + (64 << 10))                    # output blocks + misc
    vmem_limit = int(min(vmem_cap * 3 // 4, max(need + (4 << 20), 32 << 20)))
    return tile_b, tile_c, split, vmem_limit


# ---------------------------------------------------------------------------
# Wrapper
# ---------------------------------------------------------------------------
def label_smoothing_loss(x, y, alpha=0.1, *, _plan=None):
    """x: (b, c) float logits, y: (b,) int class ids in [0, c) -> scalar f32.

    Matches nn.KLDivLoss(reduction='mean')(F.log_softmax(x, 1), smoothed_onehot).
    `_plan` (tile_b, tile_c, split, vmem_limit) overrides the auto plan (tests).
    """
    b, c = x.shape
    certainty = 1.0 - alpha
    smooth = alpha / (c - 1)  # NOTE: c == 1 is undefined, as in the reference module

    # Trace-time constant: sum(label * log(label)) with the 0*log(0) -> 0 convention.
    def _xlogx(v):
        return 0.0 if v <= 0.0 else v * math.log(v)

    entropy_const = float(b) * (_xlogx(certainty) + (c - 1) * _xlogx(smooth))

    itemsize = jnp.dtype(x.dtype).itemsize
    if _plan is None:
        tile_b, tile_c, split, vmem_limit = _plan_tiles(b, c, itemsize)
    else:
        tile_b, tile_c, split, vmem_limit = _plan

    num_b = pl.cdiv(b, tile_b)
    y2d = y.astype(jnp.int32).reshape(b, 1)

    if not split:
        kernel = functools.partial(
            _ls_single_kernel, b=b, tile_b=tile_b,
            certainty=float(certainty), smooth=float(smooth))
        grid = (num_b,)
        in_specs = [
            pl.BlockSpec((tile_b, 1), lambda i: (i, 0)),        # y (class ids)
            pl.BlockSpec((tile_b, c), lambda i: (i, 0)),        # x (native dtype)
        ]
        out_specs = pl.BlockSpec((1, 1), lambda i: (i, 0))
        scratch_shapes = []
        semantics = ("parallel",)
    else:
        kernel = functools.partial(
            _ls_split_kernel, b=b, c=c, tile_b=tile_b, tile_c=tile_c,
            certainty=float(certainty), smooth=float(smooth))
        num_c = pl.cdiv(c, tile_c)
        grid = (num_b, num_c)
        in_specs = [
            pl.BlockSpec((tile_b, 1), lambda i, k: (i, 0)),     # y (constant over k)
            pl.BlockSpec((tile_b, tile_c), lambda i, k: (i, k)),  # x
        ]
        out_specs = pl.BlockSpec((1, 1), lambda i, k: (i, 0))
        scratch_shapes = [pltpu.VMEM((tile_b, 1), jnp.float32)] * 3
        semantics = ("parallel", "arbitrary")

    parts = pl.pallas_call(
        kernel,
        out_shape=jax.ShapeDtypeStruct((num_b, 1), jnp.float32),
        grid=grid,
        in_specs=in_specs,
        out_specs=out_specs,
        scratch_shapes=scratch_shapes,
        compiler_params=pltpu.CompilerParams(
            dimension_semantics=semantics,
            vmem_limit_bytes=int(vmem_limit)),
    )(y2d, x)

    cross = jnp.sum(parts)  # sum_ij label_ij * log_softmax(x)_ij
    return (entropy_const - cross) * (1.0 / (b * c))


# ---------------------------------------------------------------------------
# Pure-JAX reference + demo
# ---------------------------------------------------------------------------
def _reference(x, y, alpha=0.1):
    b, c = x.shape
    certainty = 1.0 - alpha
    label = jnp.full((b, c), alpha / (c - 1), dtype=jnp.float32)
    label = label.at[jnp.arange(b), y].set(certainty)
    logp = jax.nn.log_softmax(x.astype(jnp.float32), axis=1)
    return jnp.mean(label * (jnp.log(label) - logp))


if __name__ == "__main__":
    key = jax.random.PRNGKey(0)
    k1, k2, k3, k4, k5, k6 = jax.random.split(key, 6)

    # 1) Default auto-planned path (small single-block case, b=8, c=32).
    b, c = 8, 32
    x = jax.random.normal(k1, (b, c), dtype=jnp.float32)
    y = jax.random.randint(k2, (b,), 0, c, dtype=jnp.int32)
    out = label_smoothing_loss(x, y, alpha=0.1)
    jax.block_until_ready(out)
    ref = _reference(x, y, alpha=0.1)
    assert jnp.allclose(out, ref, atol=1e-5, rtol=1e-5), (out, ref)

    # 2) Forced multi-tile single-pass plan with a partial last batch tile
    #    (exercises the row-mask + parallel per-tile partials).
    b2, c2 = 20, 32
    x2 = jax.random.normal(k3, (b2, c2), dtype=jnp.float32)
    y2 = jax.random.randint(k4, (b2,), 0, c2, dtype=jnp.int32)
    out2 = label_smoothing_loss(x2, y2, alpha=0.1, _plan=(8, c2, False, 32 << 20))
    jax.block_until_ready(out2)
    ref2 = _reference(x2, y2, alpha=0.1)
    assert jnp.allclose(out2, ref2, atol=1e-5, rtol=1e-5), (out2, ref2)

    # 3) Forced class-split plan with a partial class tile (exercises the
    #    online-logsumexp path and the column mask).
    b3, c3 = 16, 160
    x3 = jax.random.normal(k5, (b3, c3), dtype=jnp.float32)
    y3 = jax.random.randint(k6, (b3,), 0, c3, dtype=jnp.int32)
    out3 = label_smoothing_loss(x3, y3, alpha=0.1, _plan=(8, 128, True, 32 << 20))
    jax.block_until_ready(out3)
    ref3 = _reference(x3, y3, alpha=0.1)
    assert jnp.allclose(out3, ref3, atol=1e-5, rtol=1e-5), (out3, ref3)

    print("KERNEL_OK")
</pallas_src>

<mosaic_0001>
module attributes {stable_mosaic.version = 11 : i64} {
  func.func @_ls_single_kernel(%arg0: i32, %arg1: memref<8x1xi32, #tpu.memory_space<vmem>>, %arg2: memref<8x32xf32, #tpu.memory_space<vmem>>, %arg3: memref<1x1xf32, #tpu.memory_space<vmem>>) attributes {dimension_semantics = [#tpu.dimension_semantics<parallel>], iteration_bounds = array<i64: 1>, scalar_prefetch = 0 : i64, scratch_operands = 0 : i64, tpu.core_type = #tpu.core_type<tc>, window_params = [{transform_indices = @transform_0, window_bounds = array<i64: 8, 1>}, {transform_indices = @transform_1, window_bounds = array<i64: 8, 32>}, {transform_indices = @transform_2, window_bounds = array<i64: 1, 1>}]} {
    %c0 = arith.constant 0 : index
    %c0_0 = arith.constant 0 : index
    %0 = vector.load %arg2[%c0, %c0_0] : memref<8x32xf32, #tpu.memory_space<vmem>>, vector<8x32xf32>
    %c0_1 = arith.constant 0 : index
    %c0_2 = arith.constant 0 : index
    %1 = vector.load %arg1[%c0_1, %c0_2] : memref<8x1xi32, #tpu.memory_space<vmem>>, vector<8x1xi32>
    %2 = tpu.iota {dimensions = array<i32: 1>} : vector<8x32xi32>
    %3 = vector.broadcast %1 : vector<8x1xi32> to vector<8x32xi32>
    %4 = arith.cmpi eq, %2, %3 : vector<8x32xi32>
    %cst = arith.constant 0.899999976 : f32
    %cst_3 = arith.constant 0.0032258064 : f32
    %5 = vector.broadcast %cst : f32 to vector<8x32xf32>
    %6 = vector.broadcast %cst_3 : f32 to vector<8x32xf32>
    %7 = arith.select %4, %5, %6 : vector<8x32xi1>, vector<8x32xf32>
    %8 = arith.mulf %7, %0 : vector<8x32xf32>
    %cst_4 = arith.constant dense<0.000000e+00> : vector<8xf32>
    %9 = vector.multi_reduction <add>, %8, %cst_4 [1] : vector<8x32xf32> to vector<8xf32>
    %10 = vector.shape_cast %9 : vector<8xf32> to vector<8x1xf32>
    %cst_5 = arith.constant dense<0xFF800000> : vector<8xf32>
    %11 = vector.multi_reduction <maximumf>, %0, %cst_5 [1] : vector<8x32xf32> to vector<8xf32>
    %12 = vector.shape_cast %11 : vector<8xf32> to vector<8x1xf32>
    %13 = vector.broadcast %12 : vector<8x1xf32> to vector<8x32xf32>
    %14 = arith.subf %0, %13 : vector<8x32xf32>
    %15 = math.exp %14 : vector<8x32xf32>
    %cst_6 = arith.constant dense<0.000000e+00> : vector<8xf32>
    %16 = vector.multi_reduction <add>, %15, %cst_6 [1] : vector<8x32xf32> to vector<8xf32>
    %17 = vector.shape_cast %16 : vector<8xf32> to vector<8x1xf32>
    %18 = math.log %17 : vector<8x1xf32>
    %19 = arith.addf %18, %12 : vector<8x1xf32>
    %20 = arith.subf %10, %19 : vector<8x1xf32>
    %c8_i32 = arith.constant 8 : i32
    %21 = arith.muli %arg0, %c8_i32 : i32
    %22 = tpu.iota {dimensions = array<i32: 0>} : vector<8x1xi32>
    %23 = vector.broadcast %21 : i32 to vector<8x1xi32>
    %24 = arith.addi %23, %22 : vector<8x1xi32>
    %c8_i32_7 = arith.constant 8 : i32
    %25 = vector.broadcast %c8_i32_7 : i32 to vector<8x1xi32>
    %26 = arith.cmpi slt, %24, %25 : vector<8x1xi32>
    %cst_8 = arith.constant 0.000000e+00 : f32
    %27 = vector.broadcast %cst_8 : f32 to vector<8x1xf32>
    %28 = arith.select %26, %20, %27 : vector<8x1xi1>, vector<8x1xf32>
    %cst_9 = arith.constant dense<0.000000e+00> : vector<1xf32>
    %29 = vector.multi_reduction <add>, %28, %cst_9 [0] : vector<8x1xf32> to vector<1xf32>
    %30 = vector.shape_cast %29 : vector<1xf32> to vector<1x1xf32>
    %c0_10 = arith.constant 0 : index
    %c0_11 = arith.constant 0 : index
    %31 = vector.load %arg3[%c0_10, %c0_11] : memref<1x1xf32, #tpu.memory_space<vmem>>, vector<1x1xf32>
    tpu.vector_store %arg3[%c0_10, %c0_11], %30 {strides = array<i32>} : memref<1x1xf32, #tpu.memory_space<vmem>>, vector<1x1xf32>,
    return
  }
  func.func @transform_0(%arg0: i32) -> (i32, i32) {
    %c0_i32 = arith.constant 0 : i32
    %c0_i32_0 = arith.constant 0 : i32
    return %arg0, %c0_i32 : i32, i32
  }
  func.func @transform_1(%arg0: i32) -> (i32, i32) {
    %c0_i32 = arith.constant 0 : i32
    %c0_i32_0 = arith.constant 0 : i32
    return %arg0, %c0_i32 : i32, i32
  }
  func.func @transform_2(%arg0: i32) -> (i32, i32) {
    %c0_i32 = arith.constant 0 : i32
    %c0_i32_0 = arith.constant 0 : i32
    return %arg0, %c0_i32 : i32, i32
  }
}

</mosaic_0001>

<llo_original>
// kernel: tpu_custom_call.1
$region0: #{tpu_custom_call.1}
  #allocation0 [shape = 'u32[]', space=smem, size = 0x4, offset = 0x4, fixed_abs, tag = 'smem constant byte address 0x4 - core index']
  #allocation1 [shape = 'u32[144,128]{1,0:T(1,128)}', space=vmem, size = 0x12000, scoped, tag = 'internal scratch']
  %s0 = inlined_call_operand.vmem [shape: s32[8,1], index: 0, kind: input, shape index: {}]
  %s1 = inlined_call_operand.vmem [shape: f32[8,32], index: 1, kind: input, shape index: {}]
  %s2 = inlined_call_operand.hbm [shape: f32[1,1], index: 2, kind: output, shape index: {}]
  %s3 = sld [smem:[#allocation0]]
  $region18: #{tpu_custom_call.1} parent=0
    _
  %s5 = ssub.s32 1, %s3
  %s6 = scalar_select 0, %s5, %s3
  $region1: #{tpu_custom_call.1} parent=0
    #allocation2 [shape = 'u8[512]{0}', space=vmem, size = 0x400, scoped, tag = 'output window, operand 0, single buffered']
    #allocation3 [shape = 's32[1]{0}', space=sflag, size = 0x4, scoped, tag = 'scoped memory for tpu_custom_call.1']
    %7 = vsyncpa [#allocation3], 0
    // Predicated region
    $region2: #{tpu_custom_call.1} parent=1 // pred_check
      _
    $region3: #{tpu_custom_call.1} parent=1 // pred_check_branch
      %9 = sbr.rel (0) target = $region5
    $region4: #{tpu_custom_call.1} parent=1 // pred_region
      _
    $region5: #{tpu_custom_call.1} parent=1 // pred_fallthru
      _
    // Predicated region
    $region6: #{tpu_custom_call.1} parent=1 // pred_check
      _
    $region7: #{tpu_custom_call.1} parent=1 // pred_check_branch
      %11 = sbr.rel (0) target = $region9
    $region8: #{tpu_custom_call.1} parent=1 // pred_region
      _
    $region9: #{tpu_custom_call.1} parent=1 // pred_fallthru
      _
    %v12 = vld [vmem:[%s1] sm:$0xff]
    %v13 = vld [vmem:[%s0] sm:$0xff]
    %v14 = vlaneseq
    %v15 = vand.u32 %v14, 127
    %16 = vset.pattern.permute.xlu0 0
    %17 = vperm.xlu0 %16, %v13
    %v18 = vpop.permute.xlu0 %17
    %vm19 = vcmp.eq.s32.totalorder %v15, %v18
    %v20 = vsel %vm19, 0.9, 0.0032258064
    %v21 = vmul.f32 %v20, %v12
    %vm22 = vcmask 261120
    %v23 = vsel %vm22, %v21, 0.0
    %24 = vadd.xlane.f32.xlu0 %v23
    %v25 = vpop.xlane.xlu0 %24
    %v26 = vsel %vm22, %v12, -inf
    %27 = vmax.xlane.f32.xlu0 %v26
    %v28 = vpop.xlane.xlu0 %27
    %v29 = vsub.f32 %v12, %v28
    %v30 = vmul.f32 %v29, 1.442695
    %v31 = vpow.pop %v30
    %v32 = vsel %vm22, %v31, 0.0
    %33 = vadd.xlane.f32.xlu0 %v32
    %v34 = vpop.xlane.xlu0 %33
    %v35 = vlog2.pop %v34
    %v36 = vmul.f32 %v35, 0.6931472
    %v37 = vadd.f32 %v36, %v28
    %v38 = vsub.f32 %v25, %v37
    %s39 = smul.u32 0, 8
    %v40 = vlaneseq
    %v41 = vshrl.u32 %v40, 7
    %v42 = vstv %s39
    %v43 = vadd.s32 %v42, %v41
    %vm44 = vcmp.lt.s32.totalorder %v43, 8
    %v45 = vsel %vm44, %v38, 0.0
    %v46 = vrot.slane %v45, 4
    %v47 = vadd.f32 %v45, %v46
    %v48 = vrot.slane %v47, 2
    %v49 = vadd.f32 %v47, %v48
    %v50 = vrot.slane %v49, 1
    %v51 = vadd.f32 %v49, %v50
    %vm52 = vcmask 0
    %53 = vst.msk [vmem:[#allocation2] sm:$0x1] %vm52, %v51
    // Predicated region
    $region10: #{tpu_custom_call.1} parent=1 // pred_check
      _
    $region11: #{tpu_custom_call.1} parent=1 // pred_check_branch
      %55 = sbr.rel (0) target = $region13
    $region12: #{tpu_custom_call.1} parent=1 // pred_region
      %s57 = ssub.s32 16, 16
      %58 = vsyncadd [#allocation3], %s57
      %s60 = sshll.u32 [#allocation2], 4
      %s61 = int_to_ptr.vmem [resolvable:$true] %s60
      %63 = dma.vmem_to_hbm [thread:$0]  %s61, 16, %s2, [#allocation3]
    $region13: #{tpu_custom_call.1} parent=1 // pred_fallthru
      _
    // Predicated region
    $region14: #{tpu_custom_call.1} parent=1 // pred_check
      _
    $region15: #{tpu_custom_call.1} parent=1 // pred_check_branch
      %65 = sbr.rel (0) target = $region17
    $region16: #{tpu_custom_call.1} parent=1 // pred_region
      %66 = dma.done [#allocation3], 16
    $region17: #{tpu_custom_call.1} parent=1 // pred_fallthru
      _
    %67 = vsyncpa [#allocation3], 1

</llo_original>
